<compile_context>
chip_gen: v5e
topology: v5e:2x2
jax: 0.10.0
libtpu: 0.0.40
codegen_flags: <defaults>
</compile_context>

<pallas_src>
import functools
import math

import jax
import jax.numpy as jnp
from jax.experimental import pallas as pl
from jax.experimental.pallas import tpu as pltpu

SUBLANE = 8     # f32 sublane height — batch tile is a multiple of this


# ----------------------------- fused Pallas kernel ---------------------------

def _make_fused_mlp_kernel(n_layers, relu_flags, res_flags, narrow_flags):
    """Whole MLP in one kernel body (statically unrolled over layers).

    relu_flags[i] / res_flags[i] / narrow_flags[i] are static per-layer
    booleans.  The residual gate mirrors PyTorch's `x.shape == prev_x.shape`
    check (decided at trace time from logical dims) and the add happens
    BEFORE the activation, exactly like the module's layer ordering.
    """
    def kernel(x_ref, *refs):
        out_ref = refs[-1]
        wb = refs[:-1]                        # w0, b0, w1, b1, ...
        x = x_ref[...].astype(jnp.float32)    # activations stay in vregs/VMEM
        for i in range(n_layers):             # static unroll over layers
            w_ref = wb[2 * i]
            b = wb[2 * i + 1][...].astype(jnp.float32)
            if narrow_flags[i]:
                # Final ->1 layer: VPU multiply + lane reduce (XLU).  Avoids a
                # padded N=128 MXU pass and pairs with the (tm, 1) output
                # store.  Cast x to the weight dtype first so values match the
                # MXU bf16 path exactly.
                xw = x.astype(w_ref.dtype).astype(jnp.float32)
                w_row = w_ref[...].astype(jnp.float32)           # (1, K)
                y = jnp.sum(xw * w_row, axis=-1, keepdims=True) + b
            else:
                y = jnp.dot(x.astype(w_ref.dtype), w_ref[...],
                            preferred_element_type=jnp.float32) + b
            if res_flags[i]:
                y = y + x                     # residual before activation
            if relu_flags[i]:
                y = jnp.maximum(y, 0.0)
            x = y
        out_ref[...] = x.astype(out_ref.dtype)
    return kernel


def unconstrained_net_forward(params, x, *, residual=False,
                              block_batch=2048,
                              vmem_limit_bytes=None):
    """Fused Pallas forward for the Linear->ReLU->...->Linear(->1) stack.

    `params` is a list of (w[in, out], b[out]) in kernel layout.  Weight dtype
    (e.g. bf16 for the full-rate MXU path on v6e/v7x) is chosen at init/prep
    time; the only per-call reshapes here are free (bias -> (1, out), final
    (K, 1) column -> (1, K) row).
    """
    B, d_in = x.shape
    n = len(params)
    dims = [d_in] + [w.shape[1] for (w, _) in params]      # logical widths

    relu_flags = tuple(i < n - 1 for i in range(n))          # no ReLU after final ->1
    res_flags = tuple(bool(residual) and dims[i] == dims[i + 1] for i in range(n))
    narrow_flags = tuple(i == n - 1 and dims[i + 1] == 1 for i in range(n))

    # ---- batch tile: as large as the VMEM budget allows (per-step overhead
    # dominates small tiles), rounded to the f32 sublane height. ----
    cap = int(vmem_limit_bytes) if vmem_limit_bytes is not None else 48 * 1024 * 1024
    weight_bytes = sum(int(w.size) * w.dtype.itemsize + int(b.size) * 4
                       for (w, b) in params)

    def est_vmem(tm_):
        io = 2 * tm_ * d_in * 4 + 2 * tm_ * dims[-1] * 4     # double-buffered x / out
        act = 2 * tm_ * max(dims) * 4                        # two live f32 activations
        return 2 * weight_bytes + io + act + (2 << 20)        # 2x weights: conservative

    if est_vmem(SUBLANE) > cap:
        # TODO(synk): K/N-tiled grid with an f32 scratch accumulator for weight
        # stacks too wide to stay VMEM-resident (matters on v7x's 64 MiB/TC).
        raise NotImplementedError(
            "resident weights exceed the VMEM budget; tiled fallback not implemented")

    tm = max(SUBLANE, (min(B, block_batch) // SUBLANE) * SUBLANE)
    while tm > SUBLANE and est_vmem(tm) > cap:
        tm = max(SUBLANE, (tm // 2 // SUBLANE) * SUBLANE)

    grid = (pl.cdiv(B, tm),)      # partial last block: garbage rows only land in
                                  # output rows >= B, which are never written back.

    # ---- flat inputs + specs: x streamed per batch tile; every weight/bias is
    # VMEM-resident (constant index_map -> DMA'd once, not per grid step). ----
    flat_inputs = [x]
    in_specs = [pl.BlockSpec((tm, d_in), lambda i: (i, 0))]
    for li, (w, b) in enumerate(params):
        k, m = dims[li], dims[li + 1]
        if narrow_flags[li]:
            w_k = w.reshape(1, k)                       # (K,1) column -> (1,K) row
            b_k = b.reshape(1, 1).astype(jnp.float32)
        else:
            w_k = w
            b_k = b.reshape(1, m).astype(jnp.float32)
        flat_inputs += [w_k, b_k]
        in_specs += [pl.BlockSpec(w_k.shape, lambda i: (0, 0)),
                     pl.BlockSpec(b_k.shape, lambda i: (0, 0))]
    # NOTE: if the streamed x DMA is still exposed, pipeline_mode=pl.Buffered(3)
    # on in_specs[0] is the next lever; left at the default double-buffer here.

    kernel = _make_fused_mlp_kernel(n, relu_flags, res_flags, narrow_flags)

    return pl.pallas_call(
        kernel,
        out_shape=jax.ShapeDtypeStruct((B, dims[-1]), x.dtype),
        grid=grid,
        in_specs=in_specs,
        out_specs=pl.BlockSpec((tm, dims[-1]), lambda i: (i, 0)),
        compiler_params=pltpu.CompilerParams(
            dimension_semantics=("parallel",),      # megacore sharding on v7x
            vmem_limit_bytes=cap),
    )(*flat_inputs)


# --------------------------- model: params + fwd ----------------------------

def xavier_uniform(key, fan_in, fan_out, dtype=jnp.float32):
    # Matches torch.nn.init.xavier_uniform_ (gain=1).
    bound = math.sqrt(6.0 / (fan_in + fan_out))
    # PyTorch weight is [out, in]; we store [in, out] for the kernel layout.
    return jax.random.uniform(key, (fan_in, fan_out), dtype=dtype,
                              minval=-bound, maxval=bound)


def init_params(key, input_dim, layer_dims, param_dtype=jnp.float32):
    """Linear stack: input_dim -> layer_dims[...] -> 1.  Biases zero-init.

    param_dtype=jnp.bfloat16 gives the full-rate MXU path on v6e/v7x and halves
    weight DMA bytes (the kernel still accumulates and runs the epilogue in
    f32).  The cast happens HERE, once, not per forward call.
    """
    dims = [input_dim] + list(layer_dims) + [1]
    params = []
    for i in range(len(dims) - 1):
        key, sub = jax.random.split(key)
        w = xavier_uniform(sub, dims[i], dims[i + 1]).astype(param_dtype)
        b = jnp.zeros((dims[i + 1],), dtype=jnp.float32)
        params.append((w, b))
    return params


def reference_forward(params, x, *, residual=False):
    """Plain-JAX reference mirroring the PyTorch forward (residual gated on
    shape equality, added after each Linear and before the ReLU)."""
    n = len(params)
    x = x.astype(jnp.float32)
    for i, (w, b) in enumerate(params):
        y = jnp.dot(x.astype(w.dtype), w, preferred_element_type=jnp.float32)
        y = y + b.astype(jnp.float32)
        if residual and y.shape == x.shape:
            y = y + x
        if i < n - 1:
            y = jnp.maximum(y, 0.0)
        x = y
    return x


# ---------------------------------- main -------------------------------------

if __name__ == "__main__":
    key = jax.random.PRNGKey(0)
    key, k_x, k_p = jax.random.split(key, 3)

    batch = 20                 # deliberately NOT a tile multiple -> partial last block
    input_dim = 32
    layer_dims = [32, 32]      # hidden sizes match input -> residuals kick in
    residual = True

    x = jax.random.normal(k_x, (batch, input_dim), dtype=jnp.float32)
    params = init_params(k_p, input_dim, layer_dims, param_dtype=jnp.float32)

    # Small block_batch to force grid > 1 at this tiny demo batch.
    fwd = jax.jit(functools.partial(unconstrained_net_forward,
                                    residual=residual, block_batch=16))

    # ---- f32 weights ----
    out = jax.block_until_ready(fwd(params, x))
    ref = reference_forward(params, x, residual=residual)
    assert out.shape == (batch, 1)
    # Tolerance absorbs MXU precision-pass differences (f32 matmul emulation /
    # bf16 rounding); structural bugs would show errors orders of magnitude larger.
    assert jnp.allclose(out, ref, atol=1e-2, rtol=1e-2), (
        f"f32 max err {float(jnp.max(jnp.abs(out - ref)))}")

    # ---- bf16 MXU fast path (cast hoisted to param prep, not per call) ----
    params_bf16 = [(w.astype(jnp.bfloat16), b) for (w, b) in params]
    out_bf16 = jax.block_until_ready(fwd(params_bf16, x))
    ref_bf16 = reference_forward(params_bf16, x, residual=residual)
    assert out_bf16.shape == (batch, 1)
    assert jnp.allclose(out_bf16, ref_bf16, atol=1e-2, rtol=1e-2), (
        f"bf16 max err {float(jnp.max(jnp.abs(out_bf16 - ref_bf16)))}")

    # TODO(synk): dropout_rate>0 (training-mode RNG), batch_norm=True and
    # non-ReLU activation_fn paths not implemented (module defaults are
    # 0.0 / False / 'relu'); eval-mode dropout is identity.

    print("KERNEL_OK")
</pallas_src>

<mosaic_0001>
module attributes {stable_mosaic.version = 11 : i64} {
  func.func @kernel(%arg0: i32, %arg1: memref<16x32xf32, #tpu.memory_space<vmem>>, %arg2: memref<32x32xf32, #tpu.memory_space<vmem>>, %arg3: memref<1x32xf32, #tpu.memory_space<vmem>>, %arg4: memref<32x32xf32, #tpu.memory_space<vmem>>, %arg5: memref<1x32xf32, #tpu.memory_space<vmem>>, %arg6: memref<1x32xf32, #tpu.memory_space<vmem>>, %arg7: memref<1x1xf32, #tpu.memory_space<vmem>>, %arg8: memref<16x1xf32, #tpu.memory_space<vmem>>) attributes {dimension_semantics = [#tpu.dimension_semantics<parallel>], iteration_bounds = array<i64: 2>, scalar_prefetch = 0 : i64, scratch_operands = 0 : i64, tpu.core_type = #tpu.core_type<tc>, window_params = [{transform_indices = @transform_0, window_bounds = array<i64: 16, 32>}, {pipeline_mode = #tpu.pipeline_mode<synchronous>, transform_indices = @transform_1, window_bounds = array<i64: 32, 32>}, {pipeline_mode = #tpu.pipeline_mode<synchronous>, transform_indices = @transform_2, window_bounds = array<i64: 1, 32>}, {pipeline_mode = #tpu.pipeline_mode<synchronous>, transform_indices = @transform_3, window_bounds = array<i64: 32, 32>}, {pipeline_mode = #tpu.pipeline_mode<synchronous>, transform_indices = @transform_4, window_bounds = array<i64: 1, 32>}, {pipeline_mode = #tpu.pipeline_mode<synchronous>, transform_indices = @transform_5, window_bounds = array<i64: 1, 32>}, {pipeline_mode = #tpu.pipeline_mode<synchronous>, transform_indices = @transform_6, window_bounds = array<i64: 1, 1>}, {transform_indices = @transform_7, window_bounds = array<i64: 16, 1>}]} {
    %c0 = arith.constant 0 : index
    %c0_0 = arith.constant 0 : index
    %0 = vector.load %arg1[%c0, %c0_0] : memref<16x32xf32, #tpu.memory_space<vmem>>, vector<16x32xf32>
    %c0_1 = arith.constant 0 : index
    %c0_2 = arith.constant 0 : index
    %1 = vector.load %arg3[%c0_1, %c0_2] : memref<1x32xf32, #tpu.memory_space<vmem>>, vector<1x32xf32>
    %c0_3 = arith.constant 0 : index
    %c0_4 = arith.constant 0 : index
    %2 = vector.load %arg2[%c0_3, %c0_4] : memref<32x32xf32, #tpu.memory_space<vmem>>, vector<32x32xf32>
    %cst = arith.constant dense<0.000000e+00> : vector<16x32xf32>
    %3 = tpu.matmul %0, %2, %cst {dimension_numbers = #tpu.dot_dimension_numbers<[1], [0], [0], [1], [0, 0, 1, 1], [], []>} : vector<16x32xf32>, vector<32x32xf32>, vector<16x32xf32> -> vector<16x32xf32>
    %4 = vector.broadcast %1 : vector<1x32xf32> to vector<16x32xf32>
    %5 = arith.addf %3, %4 : vector<16x32xf32>
    %6 = arith.addf %5, %0 : vector<16x32xf32>
    %cst_5 = arith.constant 0.000000e+00 : f32
    %7 = vector.broadcast %cst_5 : f32 to vector<16x32xf32>
    %8 = arith.maximumf %6, %7 : vector<16x32xf32>
    %c0_6 = arith.constant 0 : index
    %c0_7 = arith.constant 0 : index
    %9 = vector.load %arg5[%c0_6, %c0_7] : memref<1x32xf32, #tpu.memory_space<vmem>>, vector<1x32xf32>
    %c0_8 = arith.constant 0 : index
    %c0_9 = arith.constant 0 : index
    %10 = vector.load %arg4[%c0_8, %c0_9] : memref<32x32xf32, #tpu.memory_space<vmem>>, vector<32x32xf32>
    %cst_10 = arith.constant dense<0.000000e+00> : vector<16x32xf32>
    %11 = tpu.matmul %8, %10, %cst_10 {dimension_numbers = #tpu.dot_dimension_numbers<[1], [0], [0], [1], [0, 0, 1, 1], [], []>} : vector<16x32xf32>, vector<32x32xf32>, vector<16x32xf32> -> vector<16x32xf32>
    %12 = vector.broadcast %9 : vector<1x32xf32> to vector<16x32xf32>
    %13 = arith.addf %11, %12 : vector<16x32xf32>
    %14 = arith.addf %13, %8 : vector<16x32xf32>
    %cst_11 = arith.constant 0.000000e+00 : f32
    %15 = vector.broadcast %cst_11 : f32 to vector<16x32xf32>
    %16 = arith.maximumf %14, %15 : vector<16x32xf32>
    %c0_12 = arith.constant 0 : index
    %c0_13 = arith.constant 0 : index
    %17 = vector.load %arg7[%c0_12, %c0_13] : memref<1x1xf32, #tpu.memory_space<vmem>>, vector<1x1xf32>
    %c0_14 = arith.constant 0 : index
    %c0_15 = arith.constant 0 : index
    %18 = vector.load %arg6[%c0_14, %c0_15] : memref<1x32xf32, #tpu.memory_space<vmem>>, vector<1x32xf32>
    %19 = vector.broadcast %18 : vector<1x32xf32> to vector<16x32xf32>
    %20 = arith.mulf %16, %19 : vector<16x32xf32>
    %cst_16 = arith.constant dense<0.000000e+00> : vector<16xf32>
    %21 = vector.multi_reduction <add>, %20, %cst_16 [1] : vector<16x32xf32> to vector<16xf32>
    %22 = vector.shape_cast %21 : vector<16xf32> to vector<16x1xf32>
    %23 = vector.broadcast %17 : vector<1x1xf32> to vector<16x1xf32>
    %24 = arith.addf %22, %23 : vector<16x1xf32>
    %c0_17 = arith.constant 0 : index
    %c0_18 = arith.constant 0 : index
    %25 = vector.load %arg8[%c0_17, %c0_18] : memref<16x1xf32, #tpu.memory_space<vmem>>, vector<16x1xf32>
    tpu.vector_store %arg8[%c0_17, %c0_18], %24 {strides = array<i32>} : memref<16x1xf32, #tpu.memory_space<vmem>>, vector<16x1xf32>,
    return
  }
  func.func @transform_0(%arg0: i32) -> (i32, i32) {
    %c0_i32 = arith.constant 0 : i32
    %c0_i32_0 = arith.constant 0 : i32
    return %arg0, %c0_i32 : i32, i32
  }
  func.func @transform_1(%arg0: i32) -> (i32, i32) {
    %c0_i32 = arith.constant 0 : i32
    %c0_i32_0 = arith.constant 0 : i32
    %c0_i32_1 = arith.constant 0 : i32
    return %c0_i32, %c0_i32_0 : i32, i32
  }
  func.func @transform_2(%arg0: i32) -> (i32, i32) {
    %c0_i32 = arith.constant 0 : i32
    %c0_i32_0 = arith.constant 0 : i32
    %c0_i32_1 = arith.constant 0 : i32
    return %c0_i32, %c0_i32_0 : i32, i32
  }
  func.func @transform_3(%arg0: i32) -> (i32, i32) {
    %c0_i32 = arith.constant 0 : i32
    %c0_i32_0 = arith.constant 0 : i32
    %c0_i32_1 = arith.constant 0 : i32
    return %c0_i32, %c0_i32_0 : i32, i32
  }
  func.func @transform_4(%arg0: i32) -> (i32, i32) {
    %c0_i32 = arith.constant 0 : i32
    %c0_i32_0 = arith.constant 0 : i32
    %c0_i32_1 = arith.constant 0 : i32
    return %c0_i32, %c0_i32_0 : i32, i32
  }
  func.func @transform_5(%arg0: i32) -> (i32, i32) {
    %c0_i32 = arith.constant 0 : i32
    %c0_i32_0 = arith.constant 0 : i32
    %c0_i32_1 = arith.constant 0 : i32
    return %c0_i32, %c0_i32_0 : i32, i32
  }
  func.func @transform_6(%arg0: i32) -> (i32, i32) {
    %c0_i32 = arith.constant 0 : i32
    %c0_i32_0 = arith.constant 0 : i32
    %c0_i32_1 = arith.constant 0 : i32
    return %c0_i32, %c0_i32_0 : i32, i32
  }
  func.func @transform_7(%arg0: i32) -> (i32, i32) {
    %c0_i32 = arith.constant 0 : i32
    %c0_i32_0 = arith.constant 0 : i32
    return %arg0, %c0_i32 : i32, i32
  }
}

</mosaic_0001>

<llo_original>
// kernel: unconstrained_net_forward.1
$region0: #{unconstrained_net_forward.1}
  #allocation0 [shape = 'u32[]', space=smem, size = 0x4, offset = 0x4, fixed_abs, tag = 'smem constant byte address 0x4 - core index']
  #allocation1 [shape = 'u32[72,128]{1,0:T(1,128)}', space=vmem, size = 0x9000, scoped, tag = 'internal scratch']
  #allocation2 [shape = 'f32[1,1]{1,0:T(1,128)S(1)}', space=vmem, size = 0x200, scoped, tag = 'scoped memory for unconstrained_net_forward.1']
  %s0 = inlined_call_operand.hbm [shape: f32[20,32], index: 0, kind: input, shape index: {}]
  %s1 = inlined_call_operand.hbm [shape: f32[32,32], index: 1, kind: input, shape index: {}]
  %s2 = inlined_call_operand.vmem [shape: f32[1,32], index: 2, kind: input, shape index: {}]
  %s3 = inlined_call_operand.hbm [shape: f32[32,32], index: 3, kind: input, shape index: {}]
  %s4 = inlined_call_operand.vmem [shape: f32[1,32], index: 4, kind: input, shape index: {}]
  %s5 = inlined_call_operand.vmem [shape: f32[1,32], index: 5, kind: input, shape index: {}]
  %s6 = inlined_call_operand.<no memory space> [shape: f32[1,1], index: 6, kind: input, shape index: {}]
  %s7 = inlined_call_operand.vmem [shape: f32[20,1], index: 7, kind: output, shape index: {}]
  %s8 = sld [smem:[#allocation0]]
  $region121: #{unconstrained_net_forward.1} parent=0
    _
  %s10 = ssub.s32 1, %s8
  %s11 = scalar_select 0, %s10, %s8
  %v12 = vstv %s6
  %13 = vst [vmem:[#allocation2] sm:$0x1] %v12
  $region1: #{unconstrained_net_forward.1} parent=0
    #allocation3 [shape = 'u8[16384]{0}', space=vmem, size = 0x4000, scoped, tag = 'input window, operand 0']
    #allocation4 [shape = 's32[2]{0}', space=sflag, size = 0x8, scoped, tag = 'scoped memory for unconstrained_net_forward.1']
    #allocation5 [shape = 'u8[16384]{0}', space=vmem, size = 0x4000, scoped, tag = 'input window, operand 1, single buffered']
    #allocation6 [shape = 's32[1]{0}', space=sflag, size = 0x4, scoped, tag = 'scoped memory for unconstrained_net_forward.1']
    #allocation7 [shape = 'u8[16384]{0}', space=vmem, size = 0x4000, scoped, tag = 'input window, operand 3, single buffered']
    #allocation8 [shape = 'u8[16384]{0}', space=vmem, size = 0x4000, scoped, tag = 'output window, operand 0']
    %14 = vsyncpa [#allocation4], 0
    %s15 = scalar_lea.sflag [#allocation4], 1
    %16 = vsyncpa %s15, 0
    %17 = vsyncpa [#allocation6], 0
    loop: start=0, step=1, limit=4
    $region2: #{unconstrained_net_forward.1} parent=1 // loop_pre_header
      _
    $region3: #{unconstrained_net_forward.1} parent=1 // loop_header
      %s19 = sphi 0, %s23
      %p20 = scmp.ge.s32.totalorder %s19, 4
      %s29 = sphi 0, %s31
      %s32 = sphi 0, %s29
      %s33 = sphi 0, %s32
      %s49 = sphi 0, %s33
      %s53 = sphi 0, %s53
      %s55 = sphi 0, %s53
      %s56 = sphi 0, %s55
      %s70 = sphi 0, %s56
      %s74 = sphi 0, %s74
      %s76 = sphi 0, %s74
      %s77 = sphi 0, %s76
      %s91 = sphi 0, %s77
      %s95 = sphi 0, %s95
      %s97 = sphi 0, %s95
      %s98 = sphi 0, %s97
      %s112 = sphi 0, %s98
      %s116 = sphi 0, %s116
      %s118 = sphi 0, %s116
      %s119 = sphi 0, %s118
      %s133 = sphi 0, %s119
      %s137 = sphi 0, %s137
      %s139 = sphi 0, %s137
      %s140 = sphi 0, %s139
      %s154 = sphi 0, %s140
      %s158 = sphi 0, %s158
      %s160 = sphi 0, %s158
      %s161 = sphi 0, %s160
      %s175 = sphi 0, %s161
      %s181 = sphi 0, %s183
      %s184 = sphi 0, %s181
      %s185 = sphi 0, %s184
      %s201 = sphi 0, %s185
    $region4: #{unconstrained_net_forward.1} parent=1 // loop_header_branch
      %22 = sbr.rel (%p20) target = $region8
    $region5: #{unconstrained_net_forward.1} parent=1 // loop_body
      %s24 = ssub.s32 %s19, 1
      %s25 = ssub.s32 %s19, 2
      %s26 = sadd.s32 %s19, 1
      %s27 = ssub.s32 %s19, %s26
      %p28 = scmp.eq.s32.totalorder %s27, 0
      %s30 = sadd.s32 %s29, 1
      %s31 = scalar_select %p28, %s29, %s30
      %p34 = pneg %p28
      %p35 = scmp.eq.s32.totalorder %s19, 1
      %p36 = por %p34, %p35
      %p37 = scmp.ne.s32.totalorder %s29, %s32
      %p38 = scmp.eq.s32.totalorder %s19, 0
      %p39 = por %p37, %p38
      %p40 = scmp.ne.s32.totalorder %s29, %s32
      %p41 = scmp.eq.s32.totalorder %s24, 1
      %p42 = por %p40, %p41
      %p43 = scmp.ne.s32.totalorder %s32, %s33
      %p44 = scmp.eq.s32.totalorder %s24, 0
      %p45 = por %p43, %p44
      %p46 = scmp.ne.s32.totalorder %s32, %s33
      %p47 = scmp.eq.s32.totalorder %s25, 1
      %p48 = por %p46, %p47
      %p50 = scmp.ne.s32.totalorder %s33, %s49
      %p51 = scmp.eq.s32.totalorder %s25, 0
      %p52 = por %p50, %p51
      %s54 = sadd.s32 %s53, 1
      %p57 = scmp.eq.s32.totalorder %s19, 1
      %p58 = scmp.ne.s32.totalorder %s53, %s55
      %p59 = scmp.eq.s32.totalorder %s19, 0
      %p60 = por %p58, %p59
      %p61 = scmp.ne.s32.totalorder %s53, %s55
      %p62 = scmp.eq.s32.totalorder %s24, 1
      %p63 = por %p61, %p62
      %p64 = scmp.ne.s32.totalorder %s55, %s56
      %p65 = scmp.eq.s32.totalorder %s24, 0
      %p66 = por %p64, %p65
      %p67 = scmp.ne.s32.totalorder %s55, %s56
      %p68 = scmp.eq.s32.totalorder %s25, 1
      %p69 = por %p67, %p68
      %p71 = scmp.ne.s32.totalorder %s56, %s70
      %p72 = scmp.eq.s32.totalorder %s25, 0
      %p73 = por %p71, %p72
      %s75 = sadd.s32 %s74, 1
      %p78 = scmp.eq.s32.totalorder %s19, 1
      %p79 = scmp.ne.s32.totalorder %s74, %s76
      %p80 = scmp.eq.s32.totalorder %s19, 0
      %p81 = por %p79, %p80
      %p82 = scmp.ne.s32.totalorder %s74, %s76
      %p83 = scmp.eq.s32.totalorder %s24, 1
      %p84 = por %p82, %p83
      %p85 = scmp.ne.s32.totalorder %s76, %s77
      %p86 = scmp.eq.s32.totalorder %s24, 0
      %p87 = por %p85, %p86
      %p88 = scmp.ne.s32.totalorder %s76, %s77
      %p89 = scmp.eq.s32.totalorder %s25, 1
      %p90 = por %p88, %p89
      %p92 = scmp.ne.s32.totalorder %s77, %s91
      %p93 = scmp.eq.s32.totalorder %s25, 0
      %p94 = por %p92, %p93
      %s96 = sadd.s32 %s95, 1
      %p99 = scmp.eq.s32.totalorder %s19, 1
      %p100 = scmp.ne.s32.totalorder %s95, %s97
      %p101 = scmp.eq.s32.totalorder %s19, 0
      %p102 = por %p100, %p101
      %p103 = scmp.ne.s32.totalorder %s95, %s97
      %p104 = scmp.eq.s32.totalorder %s24, 1
      %p105 = por %p103, %p104
      %p106 = scmp.ne.s32.totalorder %s97, %s98
      %p107 = scmp.eq.s32.totalorder %s24, 0
      %p108 = por %p106, %p107
      %p109 = scmp.ne.s32.totalorder %s97, %s98
      %p110 = scmp.eq.s32.totalorder %s25, 1
      %p111 = por %p109, %p110
      %p113 = scmp.ne.s32.totalorder %s98, %s112
      %p114 = scmp.eq.s32.totalorder %s25, 0
      %p115 = por %p113, %p114
      %s117 = sadd.s32 %s116, 1
      %p120 = scmp.eq.s32.totalorder %s19, 1
      %p121 = scmp.ne.s32.totalorder %s116, %s118
      %p122 = scmp.eq.s32.totalorder %s19, 0
      %p123 = por %p121, %p122
      %p124 = scmp.ne.s32.totalorder %s116, %s118
      %p125 = scmp.eq.s32.totalorder %s24, 1
      %p126 = por %p124, %p125
      %p127 = scmp.ne.s32.totalorder %s118, %s119
      %p128 = scmp.eq.s32.totalorder %s24, 0
      %p129 = por %p127, %p128
      %p130 = scmp.ne.s32.totalorder %s118, %s119
      %p131 = scmp.eq.s32.totalorder %s25, 1
      %p132 = por %p130, %p131
      %p134 = scmp.ne.s32.totalorder %s119, %s133
      %p135 = scmp.eq.s32.totalorder %s25, 0
      %p136 = por %p134, %p135
      %s138 = sadd.s32 %s137, 1
      %p141 = scmp.eq.s32.totalorder %s19, 1
      %p142 = scmp.ne.s32.totalorder %s137, %s139
      %p143 = scmp.eq.s32.totalorder %s19, 0
      %p144 = por %p142, %p143
      %p145 = scmp.ne.s32.totalorder %s137, %s139
      %p146 = scmp.eq.s32.totalorder %s24, 1
      %p147 = por %p145, %p146
      %p148 = scmp.ne.s32.totalorder %s139, %s140
      %p149 = scmp.eq.s32.totalorder %s24, 0
      %p150 = por %p148, %p149
      %p151 = scmp.ne.s32.totalorder %s139, %s140
      %p152 = scmp.eq.s32.totalorder %s25, 1
      %p153 = por %p151, %p152
      %p155 = scmp.ne.s32.totalorder %s140, %s154
      %p156 = scmp.eq.s32.totalorder %s25, 0
      %p157 = por %p155, %p156
      %s159 = sadd.s32 %s158, 1
      %p162 = scmp.eq.s32.totalorder %s19, 1
      %p163 = scmp.ne.s32.totalorder %s158, %s160
      %p164 = scmp.eq.s32.totalorder %s19, 0
      %p165 = por %p163, %p164
      %p166 = scmp.ne.s32.totalorder %s158, %s160
      %p167 = scmp.eq.s32.totalorder %s24, 1
      %p168 = por %p166, %p167
      %p169 = scmp.ne.s32.totalorder %s160, %s161
      %p170 = scmp.eq.s32.totalorder %s24, 0
      %p171 = por %p169, %p170
      %p172 = scmp.ne.s32.totalorder %s160, %s161
      %p173 = scmp.eq.s32.totalorder %s25, 1
      %p174 = por %p172, %p173
      %p176 = scmp.ne.s32.totalorder %s161, %s175
      %p177 = scmp.eq.s32.totalorder %s25, 0
      %p178 = por %p176, %p177
      %s179 = ssub.s32 %s19, %s26
      %p180 = scmp.eq.s32.totalorder %s179, 0
      %s182 = sadd.s32 %s181, 1
      %s183 = scalar_select %p180, %s181, %s182
      %p186 = pneg %p180
      %p187 = scmp.eq.s32.totalorder %s19, 1
      %p188 = por %p186, %p187
      %p189 = scmp.ne.s32.totalorder %s181, %s184
      %p190 = scmp.eq.s32.totalorder %s19, 0
      %p191 = por %p189, %p190
      %p192 = scmp.ne.s32.totalorder %s181, %s184
      %p193 = scmp.eq.s32.totalorder %s24, 1
      %p194 = por %p192, %p193
      %p195 = scmp.ne.s32.totalorder %s184, %s185
      %p196 = scmp.eq.s32.totalorder %s24, 0
      %p197 = por %p195, %p196
      %p198 = scmp.ne.s32.totalorder %s184, %s185
      %p199 = scmp.eq.s32.totalorder %s25, 1
      %p200 = por %p198, %p199
      %p202 = scmp.ne.s32.totalorder %s185, %s201
      %p203 = scmp.eq.s32.totalorder %s25, 0
      %p204 = por %p202, %p203
      %p205 = scmp.le.s32.totalorder 1, %s19
      %p206 = scmp.lt.s32.totalorder %s19, 3
      %p207 = pnand %p205, %p206
      %p208 = pneg %p207
      // Predicated region
      $region9: #{unconstrained_net_forward.1} parent=5 // pred_check
        _
      $region10: #{unconstrained_net_forward.1} parent=5 // pred_check_branch
        %210 = sbr.rel (%p207) target = $region12
      $region11: #{unconstrained_net_forward.1} parent=5 // pred_region
        %s211 = ssub.s32 %s19, 1
        // Predicated region
        $region13: #{unconstrained_net_forward.1} parent=11 // pred_check
          %p212 = pneg %p66
        $region14: #{unconstrained_net_forward.1} parent=11 // pred_check_branch
          %214 = sbr.rel (%p212) target = $region16
        $region15: #{unconstrained_net_forward.1} parent=11 // pred_region
          %216 = vsyncadd [#allocation6], 0
          %s217 = sshll.u32 %s1, 4
          %s218 = int_to_ptr.hbm [resolvable:$true] %s217
          %s219 = sshll.u32 [#allocation5], 4
          %s220 = int_to_ptr.vmem [resolvable:$true] %s219
          %225 = dma.hbm_to_vmem [thread:$0]  %s218, 512, %s220, [#allocation6], 128, 128, 8
        $region16: #{unconstrained_net_forward.1} parent=11 // pred_fallthru
          _
        // Predicated region
        $region17: #{unconstrained_net_forward.1} parent=11 // pred_check
          %p226 = pneg %p87
        $region18: #{unconstrained_net_forward.1} parent=11 // pred_check_branch
          %228 = sbr.rel (%p226) target = $region20
        $region19: #{unconstrained_net_forward.1} parent=11 // pred_region
          _
        $region20: #{unconstrained_net_forward.1} parent=11 // pred_fallthru
          _
        // Predicated region
        $region21: #{unconstrained_net_forward.1} parent=11 // pred_check
          %p229 = pneg %p108
        $region22: #{unconstrained_net_forward.1} parent=11 // pred_check_branch
          %231 = sbr.rel (%p229) target = $region24
        $region23: #{unconstrained_net_forward.1} parent=11 // pred_region
          %233 = vsyncadd [#allocation6], 0
          %s234 = sshll.u32 %s3, 4
          %s235 = int_to_ptr.hbm [resolvable:$true] %s234
          %s236 = sshll.u32 [#allocation7], 4
          %s237 = int_to_ptr.vmem [resolvable:$true] %s236
          %242 = dma.hbm_to_vmem [thread:$0]  %s235, 512, %s237, [#allocation6], 128, 128, 8
        $region24: #{unconstrained_net_forward.1} parent=11 // pred_fallthru
          _
        // Predicated region
        $region25: #{unconstrained_net_forward.1} parent=11 // pred_check
          %p243 = pneg %p129
        $region26: #{unconstrained_net_forward.1} parent=11 // pred_check_branch
          %245 = sbr.rel (%p243) target = $region28
        $region27: #{unconstrained_net_forward.1} parent=11 // pred_region
          _
        $region28: #{unconstrained_net_forward.1} parent=11 // pred_fallthru
          _
        // Predicated region
        $region29: #{unconstrained_net_forward.1} parent=11 // pred_check
          %p246 = pneg %p150
        $region30: #{unconstrained_net_forward.1} parent=11 // pred_check_branch
          %248 = sbr.rel (%p246) target = $region32
        $region31: #{unconstrained_net_forward.1} parent=11 // pred_region
          _
        $region32: #{unconstrained_net_forward.1} parent=11 // pred_fallthru
          _
        // Predicated region
        $region33: #{unconstrained_net_forward.1} parent=11 // pred_check
          %p249 = pneg %p171
        $region34: #{unconstrained_net_forward.1} parent=11 // pred_check_branch
          %251 = sbr.rel (%p249) target = $region36
        $region35: #{unconstrained_net_forward.1} parent=11 // pred_region
          _
        $region36: #{unconstrained_net_forward.1} parent=11 // pred_fallthru
          _
      $region12: #{unconstrained_net_forward.1} parent=5 // pred_fallthru
        _
      %p252 = scmp.lt.s32.totalorder %s19, 2
      // Predicated region
      $region37: #{unconstrained_net_forward.1} parent=5 // pred_check
        %p253 = pneg %p252
      $region38: #{unconstrained_net_forward.1} parent=5 // pred_check_branch
        %255 = sbr.rel (%p253) target = $region40
      $region39: #{unconstrained_net_forward.1} parent=5 // pred_region
        // Predicated region
        $region41: #{unconstrained_net_forward.1} parent=39 // pred_check
          %p256 = pneg %p39
        $region42: #{unconstrained_net_forward.1} parent=39 // pred_check_branch
          %258 = sbr.rel (%p256) target = $region44
        $region43: #{unconstrained_net_forward.1} parent=39 // pred_region
          %s259 = sand.u32 %s29, 1
          %s260 = scalar_lea.sflag [#allocation4], %s259
          %s261 = sand.u32 %s29, 1
          %s262 = smul.addr %s261, 16
          %s263 = scalar_lea.vmem [#allocation3], %s262
          %s264 = smul.u32 2, %s19
          %s265 = ssub.s32 3, %s264
          %p266 = scmp.lt.s32.totalorder %s265, 2
          %s267 = scalar_select %p266, %s265, 2
          %s268 = smul.u32 8, %s267
          %s269 = ssub.s32 16, %s268
          %s270 = sshll.u32 %s269, 4
          %271 = vsyncadd %s260, %s270
          %p272 = scmp.ne.s32.totalorder 0, %s268
          %s273 = smul.addr %s264, 8
          %s274 = scalar_lea.hbm %s0, %s273
          %s275 = smul.u32 8, %s267
          %s276 = sshll.u32 %s274, 4
          %s277 = int_to_ptr.hbm [resolvable:$true] %s276
          %s278 = sshll.u32 %s263, 4
          %s279 = int_to_ptr.vmem [resolvable:$true] %s278
          %s280 = sshll.u32 %s275, 4
          %284 = dma.hbm_to_vmem [thread:$0]  (%p272), %s277, %s280, %s279, %s260, 128, 128, 8
        $region44: #{unconstrained_net_forward.1} parent=39 // pred_fallthru
          _
      $region40: #{unconstrained_net_forward.1} parent=5 // pred_fallthru
        _
      %p285 = scmp.le.s32.totalorder 1, %s19
      %p286 = scmp.lt.s32.totalorder %s19, 3
      %p287 = pnand %p285, %p286
      %p288 = pneg %p287
      // Predicated region
      $region45: #{unconstrained_net_forward.1} parent=5 // pred_check
        _
      $region46: #{unconstrained_net_forward.1} parent=5 // pred_check_branch
        %290 = sbr.rel (%p287) target = $region48
      $region47: #{unconstrained_net_forward.1} parent=5 // pred_region
        %s291 = ssub.s32 %s19, 1
        %s292 = sand.u32 %s32, 1
        %s293 = scalar_lea.sflag [#allocation4], %s292
        %s294 = sand.u32 %s32, 1
        %s295 = smul.addr %s294, 16
        %s296 = scalar_lea.vmem [#allocation3], %s295
        // Predicated region
        $region49: #{unconstrained_net_forward.1} parent=47 // pred_check
          %p297 = pneg %p45
        $region50: #{unconstrained_net_forward.1} parent=47 // pred_check_branch
          %299 = sbr.rel (%p297) target = $region52
        $region51: #{unconstrained_net_forward.1} parent=47 // pred_region
          %301 = dma.done %s293, 256
        $region52: #{unconstrained_net_forward.1} parent=47 // pred_fallthru
          _
        // Predicated region
        $region53: #{unconstrained_net_forward.1} parent=47 // pred_check
          %p302 = pneg %p66
        $region54: #{unconstrained_net_forward.1} parent=47 // pred_check_branch
          %304 = sbr.rel (%p302) target = $region56
        $region55: #{unconstrained_net_forward.1} parent=47 // pred_region
          %306 = dma.done [#allocation6], 512
        $region56: #{unconstrained_net_forward.1} parent=47 // pred_fallthru
          _
        // Predicated region
        $region57: #{unconstrained_net_forward.1} parent=47 // pred_check
          %p307 = pneg %p108
        $region58: #{unconstrained_net_forward.1} parent=47 // pred_check_branch
          %309 = sbr.rel (%p307) target = $region60
        $region59: #{unconstrained_net_forward.1} parent=47 // pred_region
          %311 = dma.done [#allocation6], 512
        $region60: #{unconstrained_net_forward.1} parent=47 // pred_fallthru
          _
        %s312 = sand.u32 %s32, 1
        %s313 = scalar_lea.sflag [#allocation4], %s312
        %s314 = sand.u32 %s32, 1
        %s315 = smul.addr %s314, 16
        %s316 = scalar_lea.vmem [#allocation3], %s315
        %p317 = pneg %p45
        %p318 = pneg %p42
        %p319 = pneg %p66
        %p320 = pneg %p63
        %p321 = pneg %p87
        %p322 = pneg %p84
        %p323 = pneg %p108
        %p324 = pneg %p105
        %p325 = pneg %p129
        %p326 = pneg %p126
        %p327 = pneg %p150
        %p328 = pneg %p147
        %p329 = pneg %p171
        %p330 = pneg %p168
        %p331 = pneg %p197
        %p332 = pneg %p194
        %s333 = sand.u32 %s184, 1
        %s334 = sand.u32 %s184, 1
        %s335 = smul.addr %s334, 16
        %s336 = scalar_lea.vmem [#allocation8], %s335
        %s337 = smul.u32 2, %s24
        %s338 = ssub.s32 3, %s337
        %p339 = scmp.lt.s32.totalorder %s338, 2
        %s340 = scalar_select %p339, %s338, 2
        %s341 = smul.u32 8, %s340
        %s342 = smul.u32 2, %s24
        %s343 = ssub.s32 3, %s342
        %p344 = scmp.lt.s32.totalorder %s343, 2
        %s345 = scalar_select %p344, %s343, 2
        %s346 = smul.u32 8, %s345
        %v347 = vld [vmem:[%s296] sm:$0xff]
        %v348 = vld [vmem:[%s296 + $0x8] sm:$0xff]
        %v349 = vld [vmem:[%s2] sm:$0x1]
        %v350 = vld [vmem:[#allocation5] sm:$0xff]
        %v351 = vld [vmem:[#allocation5 + $0x8] sm:$0xff]
        %v352 = vld [vmem:[#allocation5 + $0x10] sm:$0xff]
        %v353 = vld [vmem:[#allocation5 + $0x18] sm:$0xff]
        %v355 = vperm.slane %v349, 0
        %vm357 = vcmask 261120
        %v359 = vsel %vm357, %v347, 0
        %v362 = vsel %vm357, %v348, 0
        %364 = vmatpush.msra.mxu0 0.0
        %365 = vmatpush.msra.mxu0 0.0
        %366 = vmatpush.msra.mxu0 0.0
        %367 = vmatpush.msra.mxu0 0.0
        %368 = vmatpush.msra.mxu0 0.0
        %369 = vmatpush.msra.mxu0 0.0
        %370 = vmatpush.msra.mxu0 0.0
        %371 = vmatpush.msra.mxu0 0.0
        %372 = vmatpush.msra.mxu0 0.0
        %373 = vmatpush.msra.mxu0 0.0
        %374 = vmatpush.msra.mxu0 0.0
        %375 = vmatpush.msra.mxu0 0.0
        %376 = vmatpush.msra.mxu0 %v353
        %377 = vmatpush.msra.mxu0 %v352
        %378 = vmatpush.msra.mxu0 %v351
        %379 = vmatpush.msra.mxu0 %v350
        %380 = vmatmul.f32.gmra.mxu0 %v359
        %v381 = vpop.f32.mrf.mxu0
        %v382 = vadd.f32 %v355, %v381
        %383 = vmatmul.f32.gmra.mxu0 %v362
        %v384 = vpop.f32.mrf.mxu0
        %v385 = vadd.f32 %v355, %v384
        %386 = vdwg.mxu0
        %v387 = vadd.f32 %v382, %v347
        %v388 = vadd.f32 %v385, %v348
        %v389 = vmax.f32 %v387, 0.0
        %v390 = vmax.f32 %v388, 0.0
        %v391 = vld [vmem:[%s4] sm:$0x1]
        %v392 = vld [vmem:[#allocation7] sm:$0xff]
        %v393 = vld [vmem:[#allocation7 + $0x8] sm:$0xff]
        %v394 = vld [vmem:[#allocation7 + $0x10] sm:$0xff]
        %v395 = vld [vmem:[#allocation7 + $0x18] sm:$0xff]
        %v397 = vperm.slane %v391, 0
        %v400 = vsel %vm357, %v389, 0
        %v403 = vsel %vm357, %v390, 0
        %405 = vmatpush.msra.mxu0 0.0
        %406 = vmatpush.msra.mxu0 0.0
        %407 = vmatpush.msra.mxu0 0.0
        %408 = vmatpush.msra.mxu0 0.0
        %409 = vmatpush.msra.mxu0 0.0
        %410 = vmatpush.msra.mxu0 0.0
        %411 = vmatpush.msra.mxu0 0.0
        %412 = vmatpush.msra.mxu0 0.0
        %413 = vmatpush.msra.mxu0 0.0
        %414 = vmatpush.msra.mxu0 0.0
        %415 = vmatpush.msra.mxu0 0.0
        %416 = vmatpush.msra.mxu0 0.0
        %417 = vmatpush.msra.mxu0 %v395
        %418 = vmatpush.msra.mxu0 %v394
        %419 = vmatpush.msra.mxu0 %v393
        %420 = vmatpush.msra.mxu0 %v392
        %421 = vmatmul.f32.gmra.mxu0 %v400
        %v422 = vpop.f32.mrf.mxu0
        %v423 = vadd.f32 %v397, %v422
        %424 = vmatmul.f32.gmra.mxu0 %v403
        %v425 = vpop.f32.mrf.mxu0
        %v426 = vadd.f32 %v397, %v425
        %427 = vdwg.mxu0
        %v428 = vadd.f32 %v423, %v389
        %v429 = vadd.f32 %v426, %v390
        %v430 = vmax.f32 %v428, 0.0
        %v431 = vmax.f32 %v429, 0.0
        %v432 = vld [vmem:[#allocation2] sm:$0x1]
        %v433 = vld [vmem:[%s5] sm:$0x1]
        %v435 = vperm.slane %v433, 0
        %v437 = vmul.f32 %v430, %v435
        %v438 = vmul.f32 %v431, %v435
        %v439 = vsel %vm357, %v437, 0.0
        %440 = vadd.xlane.f32.xlu0 %v439
        %v441 = vpop.xlane.xlu0 %440
        %v442 = vsel %vm357, %v438, 0.0
        %443 = vadd.xlane.f32.xlu0 %v442
        %v444 = vpop.xlane.xlu0 %443
        %v446 = vperm.slane %v432, 0
        %v448 = vadd.f32 %v441, %v446
        %v449 = vadd.f32 %v444, %v446
        %vm450 = vcmask 7168
        %451 = vst.msk [vmem:[%s336] sm:$0xff] %vm450, %v448
        %452 = vst.msk [vmem:[%s336 + $0x8] sm:$0xff] %vm450, %v449
        %s453 = sand.u32 %s184, 1
        %s454 = sand.u32 %s184, 1
        %s455 = smul.addr %s454, 16
        %s456 = scalar_lea.vmem [#allocation8], %s455
        // Predicated region
        $region61: #{unconstrained_net_forward.1} parent=47 // pred_check
          %p457 = pneg %p194
        $region62: #{unconstrained_net_forward.1} parent=47 // pred_check_branch
          %459 = sbr.rel (%p457) target = $region64
        $region63: #{unconstrained_net_forward.1} parent=47 // pred_region
          %s460 = smul.u32 2, %s24
          %s461 = ssub.s32 3, %s460
          %p462 = scmp.lt.s32.totalorder %s461, 2
          %s463 = scalar_select %p462, %s461, 2
          %s464 = smul.u32 8, %s463
          %p465 = scmp.ne.s32.totalorder 0, %s464
          %s466 = smul.addr %s460, 8
          %s467 = scalar_lea.vmem %s7, %s466
          // Predicated region
          $region65: #{unconstrained_net_forward.1} parent=63 // pred_check
            %p468 = pneg %p465
          $region66: #{unconstrained_net_forward.1} parent=63 // pred_check_branch
            %470 = sbr.rel (%p468) target = $region68
          $region67: #{unconstrained_net_forward.1} parent=63 // pred_region
            // Predicated region
            $region69: #{unconstrained_net_forward.1} parent=67 // pred_check
              _
            $region70: #{unconstrained_net_forward.1} parent=67 // pred_check_branch
              %472 = sbr.rel (0) target = $region72
            $region71: #{unconstrained_net_forward.1} parent=67 // pred_region
              // Predicated region
              $region91: #{unconstrained_net_forward.1} parent=71 // pred_check
                _
              $region92: #{unconstrained_net_forward.1} parent=71 // pred_check_branch
                %524 = sbr.rel (0) target = $region94
              $region93: #{unconstrained_net_forward.1} parent=71 // pred_region
                %s525 = sshrl.u32 %s463, 1
                // While loop
                $region95: #{unconstrained_net_forward.1} parent=93 // loop_pre_header
                  _
                $region96: #{unconstrained_net_forward.1} parent=93 // loop_header
                  %s527 = sphi 0, %s529
                  %p528 = scmp.ge.s32.totalorder %s527, %s525
                  %s532 = sphi 0, %s541
                  %s533 = sphi %s456, %s544
                  %s534 = sphi %s467, %s545
                $region97: #{unconstrained_net_forward.1} parent=93 // loop_header_branch
                  %531 = sbr.rel (%p528) target = $region101
                $region98: #{unconstrained_net_forward.1} parent=93 // loop_body
                  %v535 = vld [vmem:[%s533] sm:$0xff]
                  %536 = vst [vmem:[%s534] sm:$0xff] %v535
                  %v537 = vld [vmem:[%s533 + $0x8] sm:$0xff]
                  %538 = vst [vmem:[%s534 + $0x8] sm:$0xff] %v537
                  %s539 = sadd.s32 1, %s532
                  %p540 = scmp.ge.s32.totalorder %s539, %s525
                  %s541 = scalar_select %p540, 0, %s539
                  %s542 = smul.u32 %s541, 16
                  %s543 = smul.u32 %s541, 16
                  %s544 = scalar_lea.vmem %s456, %s542 [#allocation8]
                  %s545 = scalar_lea.vmem %s467, %s543
                $region99: #{unconstrained_net_forward.1} parent=93 // loop_footer
                  %s529 = sadd.s32 %s527, 1
                $region100: #{unconstrained_net_forward.1} parent=93 // loop_footer_branch
                  %526 = sbr.rel target = $region96
                $region101: #{unconstrained_net_forward.1} parent=93 // loop_exit
                  _
                %s546 = sshrl.u32 %s463, 1
                %s547 = sand.u32 %s463, 1
                %s548 = smul.u32 %s546, 2
                %s549 = smul.u32 8, %s548
                %s550 = scalar_lea.vmem %s456, %s549 [#allocation8]
                %s551 = smul.u32 8, %s548
                %s552 = scalar_lea.vmem %s467, %s551
                // While loop
                $region102: #{unconstrained_net_forward.1} parent=93 // loop_pre_header
                  _
                $region103: #{unconstrained_net_forward.1} parent=93 // loop_header
                  %s554 = sphi 0, %s556
                  %p555 = scmp.ge.s32.totalorder %s554, %s547
                  %s559 = sphi 0, %s566
                  %s560 = sphi %s550, %s569
                  %s561 = sphi %s552, %s570
                $region104: #{unconstrained_net_forward.1} parent=93 // loop_header_branch
                  %558 = sbr.rel (%p555) target = $region108
                $region105: #{unconstrained_net_forward.1} parent=93 // loop_body
                  %v562 = vld [vmem:[%s560] sm:$0xff]
                  %563 = vst [vmem:[%s561] sm:$0xff] %v562
                  %s564 = sadd.s32 1, %s559
                  %p565 = scmp.ge.s32.totalorder %s564, %s547
                  %s566 = scalar_select %p565, 0, %s564
                  %s567 = smul.u32 %s566, 8
                  %s568 = smul.u32 %s566, 8
                  %s569 = scalar_lea.vmem %s550, %s567 [#allocation8]
                  %s570 = scalar_lea.vmem %s552, %s568
                $region106: #{unconstrained_net_forward.1} parent=93 // loop_footer
                  %s556 = sadd.s32 %s554, 1
                $region107: #{unconstrained_net_forward.1} parent=93 // loop_footer_branch
                  %553 = sbr.rel target = $region103
                $region108: #{unconstrained_net_forward.1} parent=93 // loop_exit
                  _
              $region94: #{unconstrained_net_forward.1} parent=71 // pred_fallthru
                _
              // Predicated region
              $region109: #{unconstrained_net_forward.1} parent=71 // pred_check
                _
              $region110: #{unconstrained_net_forward.1} parent=71 // pred_check_branch
                %572 = sbr.rel target = $region112
              $region111: #{unconstrained_net_forward.1} parent=71 // pred_region
                _
              $region112: #{unconstrained_net_forward.1} parent=71 // pred_fallthru
                _
            $region72: #{unconstrained_net_forward.1} parent=67 // pred_fallthru
              _
            // Predicated region
            $region73: #{unconstrained_net_forward.1} parent=67 // pred_check
              _
            $region74: #{unconstrained_net_forward.1} parent=67 // pred_check_branch
              %474 = sbr.rel target = $region76
            $region75: #{unconstrained_net_forward.1} parent=67 // pred_region
              %s476 = ssub.s32 256, 1
              %s477 = sshrl.u32 %s463, 1
              // While loop
              $region77: #{unconstrained_net_forward.1} parent=75 // loop_pre_header
                _
              $region78: #{unconstrained_net_forward.1} parent=75 // loop_header
                %s479 = sphi 0, %s481
                %p480 = scmp.ge.s32.totalorder %s479, %s477
                %s484 = sphi 0, %s493
                %s485 = sphi %s456, %s496
                %s486 = sphi %s467, %s497
              $region79: #{unconstrained_net_forward.1} parent=75 // loop_header_branch
                %483 = sbr.rel (%p480) target = $region83
              $region80: #{unconstrained_net_forward.1} parent=75 // loop_body
                %v487 = vld [vmem:[%s485] sm:%s476]
                %488 = vst [vmem:[%s486] sm:%s476] %v487
                %v489 = vld [vmem:[%s485 + $0x8] sm:%s476]
                %490 = vst [vmem:[%s486 + $0x8] sm:%s476] %v489
                %s491 = sadd.s32 1, %s484
                %p492 = scmp.ge.s32.totalorder %s491, %s477
                %s493 = scalar_select %p492, 0, %s491
                %s494 = smul.u32 %s493, 16
                %s495 = smul.u32 %s493, 16
                %s496 = scalar_lea.vmem %s456, %s494 [#allocation8]
                %s497 = scalar_lea.vmem %s467, %s495
              $region81: #{unconstrained_net_forward.1} parent=75 // loop_footer
                %s481 = sadd.s32 %s479, 1
              $region82: #{unconstrained_net_forward.1} parent=75 // loop_footer_branch
                %478 = sbr.rel target = $region78
              $region83: #{unconstrained_net_forward.1} parent=75 // loop_exit
                _
              %s498 = sshrl.u32 %s463, 1
              %s499 = sand.u32 %s463, 1
              %s500 = smul.u32 %s498, 2
              %s501 = smul.u32 8, %s500
              %s502 = scalar_lea.vmem %s456, %s501 [#allocation8]
              %s503 = smul.u32 8, %s500
              %s504 = scalar_lea.vmem %s467, %s503
              // While loop
              $region84: #{unconstrained_net_forward.1} parent=75 // loop_pre_header
                _
              $region85: #{unconstrained_net_forward.1} parent=75 // loop_header
                %s506 = sphi 0, %s508
                %p507 = scmp.ge.s32.totalorder %s506, %s499
                %s511 = sphi 0, %s518
                %s512 = sphi %s502, %s521
                %s513 = sphi %s504, %s522
              $region86: #{unconstrained_net_forward.1} parent=75 // loop_header_branch
                %510 = sbr.rel (%p507) target = $region90
              $region87: #{unconstrained_net_forward.1} parent=75 // loop_body
                %v514 = vld [vmem:[%s512] sm:%s476]
                %515 = vst [vmem:[%s513] sm:%s476] %v514
                %s516 = sadd.s32 1, %s511
                %p517 = scmp.ge.s32.totalorder %s516, %s499
                %s518 = scalar_select %p517, 0, %s516
                %s519 = smul.u32 %s518, 8
                %s520 = smul.u32 %s518, 8
                %s521 = scalar_lea.vmem %s502, %s519 [#allocation8]
                %s522 = scalar_lea.vmem %s504, %s520
              $region88: #{unconstrained_net_forward.1} parent=75 // loop_footer
                %s508 = sadd.s32 %s506, 1
              $region89: #{unconstrained_net_forward.1} parent=75 // loop_footer_branch
                %505 = sbr.rel target = $region85
              $region90: #{unconstrained_net_forward.1} parent=75 // loop_exit
                _
            $region76: #{unconstrained_net_forward.1} parent=67 // pred_fallthru
              _
          $region68: #{unconstrained_net_forward.1} parent=63 // pred_fallthru
            _
          %573 = vnop
        $region64: #{unconstrained_net_forward.1} parent=47 // pred_fallthru
          _
      $region48: #{unconstrained_net_forward.1} parent=5 // pred_fallthru
        _
      %p574 = scmp.le.s32.totalorder 2, %s19
      // Predicated region
      $region113: #{unconstrained_net_forward.1} parent=5 // pred_check
        %p575 = pneg %p574
      $region114: #{unconstrained_net_forward.1} parent=5 // pred_check_branch
        %577 = sbr.rel (%p575) target = $region116
      $region115: #{unconstrained_net_forward.1} parent=5 // pred_region
        %s578 = ssub.s32 %s19, 2
        // Predicated region
        $region117: #{unconstrained_net_forward.1} parent=115 // pred_check
          %p579 = pneg %p200
        $region118: #{unconstrained_net_forward.1} parent=115 // pred_check_branch
          %581 = sbr.rel (%p579) target = $region120
        $region119: #{unconstrained_net_forward.1} parent=115 // pred_region
          %s582 = sand.u32 %s185, 1
          %s583 = sand.u32 %s185, 1
          %s584 = smul.addr %s583, 16
          %s585 = scalar_lea.vmem [#allocation8], %s584
        $region120: #{unconstrained_net_forward.1} parent=115 // pred_fallthru
          _
      $region116: #{unconstrained_net_forward.1} parent=5 // pred_fallthru
        _
    $region6: #{unconstrained_net_forward.1} parent=1 // loop_footer
      %s23 = sadd.s32 1, %s19
    $region7: #{unconstrained_net_forward.1} parent=1 // loop_footer_branch
      %18 = sbr.rel target = $region3
    $region8: #{unconstrained_net_forward.1} parent=1 // loop_exit
      _
    %586 = vsyncpa [#allocation4], 1
    %s587 = scalar_lea.sflag [#allocation4], 1
    %588 = vsyncpa %s587, 1
    %589 = vsyncpa [#allocation6], 1

</llo_original>
